<compile_context>
chip_gen: v5e
topology: v5e:2x2
jax: 0.10.0
libtpu: 0.0.40
codegen_flags: <defaults>
</compile_context>

<pallas_src>
import functools

import jax
import jax.numpy as jnp
from jax.experimental import pallas as pl
from jax.experimental.pallas import tpu as pltpu


# ---------------------------------------------------------------------------
# Fused conv (phase-decomposed, im2col-staged) + folded-BN bias + ReLU kernel
# ---------------------------------------------------------------------------
def _convblock_kernel(x_ref, w_ref, b_ref, o_ref, col_ref, *,
                      k, s, cin, th, wq, wout, lt):
    """One (batch, row-tile) grid step.

    x_ref  : (1, 1, s*s, Cin, LW) bf16  phase-decomposed, row-windowed,
                                        lane-flattened input (LW = (TH+d+1)*Wq)
    w_ref  : (Cout, K)            bf16  BN-folded weights, K = k*k*Cin
    b_ref  : (Cout, 1)            f32   BN-folded bias
    o_ref  : (1, Cout, TH, Wout)        output tile
    col_ref: (K, LT)              bf16  im2col scratch, LT = TH*Wq
    """
    # Stage the k*k shifted tap slices into the im2col scratch.  All offsets
    # are static: the row-tile base is handled by the BlockSpec, only the small
    # per-tap shift (kh//s)*Wq + (kw//s) remains.
    for kh in range(k):
        for kw in range(k):
            p = (kh % s) * s + (kw % s)          # phase plane
            off = (kh // s) * wq + (kw // s)     # static lane shift in window
            t = kh * k + kw
            col_ref[t * cin:(t + 1) * cin, :] = x_ref[0, 0, p, :, off:off + lt]

    # One deep MXU matmul: (Cout, k*k*Cin) x (k*k*Cin, TH*Wq), f32 accumulate.
    y = jnp.dot(w_ref[...], col_ref[...], preferred_element_type=jnp.float32)
    y = jnp.maximum(y + b_ref[...], 0.0)         # folded-BN bias + ReLU (f32)

    # Store the valid columns of each output row (drops the halo columns).
    for i in range(th):
        o_ref[0, :, i, :] = y[:, i * wq:i * wq + wout].astype(o_ref.dtype)


def _pick_row_tile(hout, wq, target_lanes=256):
    """Row-tile height: divides Hout and is a multiple of 8 (or == Hout)."""
    th0 = max(1, min(hout, max(1, target_lanes // max(wq, 1))))
    cands = [t for t in range(1, hout + 1)
             if hout % t == 0 and (t % 8 == 0 or t == hout)]
    le = [t for t in cands if t <= th0]
    return max(le) if le else min(cands)


# ---------------------------------------------------------------------------
# Wrapper: BN folding, phase decomposition, windowing, pallas_call
# ---------------------------------------------------------------------------
def conv_block_forward(x, weight, gamma, beta, running_mean, running_var,
                       *, stride, eps=1e-5):
    N, Cin, H, W = x.shape
    Cout, Cin_w, k, k2 = weight.shape
    assert Cin_w == Cin and k == k2
    s = int(stride)
    pad = k // 2
    Hout = (H + 2 * pad - k) // s + 1
    Wout = (W + 2 * pad - k) // s + 1
    d = (k - 1) // s                 # max unit shift inside a phase image
    P = s * s                        # number of stride phases
    K = k * k * Cin                  # stacked contraction depth

    # ---- fold inference BatchNorm into the conv weights / bias -------------
    scale = gamma * jax.lax.rsqrt(running_var + eps)                  # (Cout,)
    w_f = weight * scale[:, None, None, None]
    b_f = (beta - running_mean * scale).astype(jnp.float32).reshape(Cout, 1)
    # (Cout, Cin, kh, kw) -> (Cout, kh, kw, Cin) -> (Cout, K): row t*Cin+c of
    # the im2col scratch holds tap t = kh*k+kw, channel c.
    w2d = jnp.transpose(w_f, (0, 2, 3, 1)).reshape(Cout, K).astype(jnp.bfloat16)

    # ---- tiling -------------------------------------------------------------
    Wq = Wout + d                    # phase-image width (valid cols + halo)
    TH = _pick_row_tile(Hout, Wq)    # output rows per tile (divides Hout)
    RT = Hout // TH                  # row tiles per image
    TR = TH + d + 1                  # window rows (+1: flattened tap slices
                                     #  never run off the window)
    LT = TH * Wq                     # matmul lane count per tile
    LW = TR * Wq                     # flattened window length

    # ---- pad + phase-decompose + window the input (wrapper-side, bf16) -----
    Hq = RT * TH + d + 1             # phase rows needed
    Hp_tot, Wp_tot = Hq * s, Wq * s
    h_keep = max(0, min(H, Hp_tot - pad))
    w_keep = max(0, min(W, Wp_tot - pad))
    x_b = x.astype(jnp.bfloat16)
    x_pad = jnp.zeros((N, Cin, Hp_tot, Wp_tot), jnp.bfloat16)
    x_pad = x_pad.at[:, :, pad:pad + h_keep, pad:pad + w_keep].set(
        x_b[:, :, :h_keep, :w_keep])
    # phases: xq[n, py*s+px, c, i, j] = x_pad[n, c, i*s+py, j*s+px]
    xq = x_pad.reshape(N, Cin, Hq, s, Wq, s)
    xq = jnp.transpose(xq, (0, 3, 5, 1, 2, 4)).reshape(N, P, Cin, Hq, Wq)
    # overlapping row windows (halo of d+1 rows), lane-flattened
    row_idx = jnp.arange(RT)[:, None] * TH + jnp.arange(TR)[None, :]  # (RT,TR)
    xw = jnp.take(xq, row_idx, axis=3)                # (N, P, Cin, RT, TR, Wq)
    xw = jnp.transpose(xw, (0, 3, 1, 2, 4, 5)).reshape(N, RT, P, Cin, LW)

    # ---- pallas_call --------------------------------------------------------
    kernel = functools.partial(_convblock_kernel, k=k, s=s, cin=Cin, th=TH,
                               wq=Wq, wout=Wout, lt=LT)
    out_dtype = x.dtype
    flops = 2 * N * RT * Cout * K * LT
    bytes_accessed = (xw.size * 2 + w2d.size * 2 + b_f.size * 4
                      + N * Cout * Hout * Wout * jnp.dtype(out_dtype).itemsize)
    blk_bytes = (2 * (P * Cin * LW * 2 + Cout * TH * Wout * 4)
                 + Cout * K * 2 + Cout * 4 + K * LT * 2)
    vmem_limit = int(min(64 * 2**20, max(16 * 2**20, 4 * blk_bytes)))

    out = pl.pallas_call(
        kernel,
        out_shape=jax.ShapeDtypeStruct((N, Cout, Hout, Wout), out_dtype),
        grid=(N, RT),
        in_specs=[
            pl.BlockSpec((1, 1, P, Cin, LW), lambda n, r: (n, r, 0, 0, 0)),
            pl.BlockSpec((Cout, K), lambda n, r: (0, 0)),
            pl.BlockSpec((Cout, 1), lambda n, r: (0, 0)),
        ],
        out_specs=pl.BlockSpec((1, Cout, TH, Wout), lambda n, r: (n, 0, r, 0)),
        scratch_shapes=[pltpu.VMEM((K, LT), jnp.bfloat16)],
        compiler_params=pltpu.CompilerParams(
            dimension_semantics=("parallel", "parallel"),
            vmem_limit_bytes=vmem_limit),
        cost_estimate=pl.CostEstimate(flops=flops, transcendentals=0,
                                      bytes_accessed=bytes_accessed),
    )(xw, w2d, b_f)
    return out


# ---------------------------------------------------------------------------
# Pure-JAX reference (correctness check only)
# ---------------------------------------------------------------------------
def _ref_forward(x, weight, gamma, beta, mean, var, *, stride, eps=1e-5):
    k = weight.shape[2]
    pad = k // 2
    y = jax.lax.conv_general_dilated(
        x, weight, window_strides=(stride, stride),
        padding=[(pad, pad), (pad, pad)],
        dimension_numbers=("NCHW", "OIHW", "NCHW"),
        precision=jax.lax.Precision.HIGHEST)
    scale = gamma / jnp.sqrt(var + eps)
    y = y * scale[None, :, None, None] + (beta - mean * scale)[None, :, None, None]
    return jnp.maximum(y, 0.0)


if __name__ == "__main__":
    key = jax.random.PRNGKey(0)
    keys = jax.random.split(key, 7)
    N, Cin, H, W = 2, 4, 16, 16
    Cout = 8

    x = jax.random.normal(keys[0], (N, Cin, H, W), dtype=jnp.float32)
    gamma = 1.0 + 0.1 * jax.random.normal(keys[1], (Cout,), dtype=jnp.float32)
    beta = 0.1 * jax.random.normal(keys[2], (Cout,), dtype=jnp.float32)
    running_mean = 0.1 * jax.random.normal(keys[3], (Cout,), dtype=jnp.float32)
    running_var = jax.random.uniform(keys[4], (Cout,), dtype=jnp.float32,
                                     minval=0.5, maxval=1.5)

    # Two ConvBlock configs: (kernel=3, stride=1) and (kernel=5, stride=2).
    for (ksize, stride), wkey in (((3, 1), keys[5]), ((5, 2), keys[6])):
        weight = 0.1 * jax.random.normal(wkey, (Cout, Cin, ksize, ksize),
                                         dtype=jnp.float32)
        out = conv_block_forward(x, weight, gamma, beta, running_mean,
                                 running_var, stride=stride)
        out = jax.block_until_ready(out)

        ref = _ref_forward(x, weight, gamma, beta, running_mean, running_var,
                           stride=stride)
        pad = ksize // 2
        Hout = (H + 2 * pad - ksize) // stride + 1
        Wout = (W + 2 * pad - ksize) // stride + 1
        assert out.shape == (N, Cout, Hout, Wout), out.shape
        err = float(jnp.max(jnp.abs(out - ref)))
        # bf16 inputs/weights with f32 accumulation -> loosened tolerance.
        assert jnp.allclose(out, ref, atol=3e-2, rtol=3e-2), (ksize, stride, err)

    print("KERNEL_OK")
</pallas_src>

<mosaic_0001>
module attributes {stable_mosaic.version = 11 : i64} {
  func.func @_convblock_kernel(%arg0: i32, %arg1: i32, %arg2: memref<1x1x1x4x198xbf16, #tpu.memory_space<vmem>>, %arg3: memref<8x36xbf16, #tpu.memory_space<vmem>>, %arg4: memref<8x1xf32, #tpu.memory_space<vmem>>, %arg5: memref<1x8x8x16xf32, #tpu.memory_space<vmem>>, %arg6: memref<36x144xbf16, #tpu.memory_space<vmem>>) attributes {dimension_semantics = [#tpu.dimension_semantics<parallel>, #tpu.dimension_semantics<parallel>], iteration_bounds = array<i64: 2, 2>, scalar_prefetch = 0 : i64, scratch_operands = 1 : i64, tpu.core_type = #tpu.core_type<tc>, window_params = [{transform_indices = @transform_0, window_bounds = array<i64: 1, 1, 1, 4, 198>}, {pipeline_mode = #tpu.pipeline_mode<synchronous>, transform_indices = @transform_1, window_bounds = array<i64: 8, 36>}, {pipeline_mode = #tpu.pipeline_mode<synchronous>, transform_indices = @transform_2, window_bounds = array<i64: 8, 1>}, {transform_indices = @transform_3, window_bounds = array<i64: 1, 8, 8, 16>}]} {
    %c0 = arith.constant 0 : index
    %c0_0 = arith.constant 0 : index
    %c0_1 = arith.constant 0 : index
    %c0_2 = arith.constant 0 : index
    %c0_3 = arith.constant 0 : index
    %0 = vector.load %arg2[%c0, %c0_0, %c0_1, %c0_2, %c0_3] : memref<1x1x1x4x198xbf16, #tpu.memory_space<vmem>>, vector<1x1x1x4x144xbf16>
    %1 = vector.shape_cast %0 : vector<1x1x1x4x144xbf16> to vector<4x144xbf16>
    %c0_4 = arith.constant 0 : index
    %c0_5 = arith.constant 0 : index
    %2 = vector.load %arg6[%c0_4, %c0_5] : memref<36x144xbf16, #tpu.memory_space<vmem>>, vector<4x144xbf16>
    tpu.vector_store %arg6[%c0_4, %c0_5], %1 {strides = array<i32>} : memref<36x144xbf16, #tpu.memory_space<vmem>>, vector<4x144xbf16>,
    %c0_6 = arith.constant 0 : index
    %c0_7 = arith.constant 0 : index
    %c0_8 = arith.constant 0 : index
    %c0_9 = arith.constant 0 : index
    %c1 = arith.constant 1 : index
    %3 = vector.load %arg2[%c0_6, %c0_7, %c0_8, %c0_9, %c1] : memref<1x1x1x4x198xbf16, #tpu.memory_space<vmem>>, vector<1x1x1x4x144xbf16>
    %4 = vector.shape_cast %3 : vector<1x1x1x4x144xbf16> to vector<4x144xbf16>
    %c4 = arith.constant 4 : index
    %c0_10 = arith.constant 0 : index
    %5 = vector.load %arg6[%c4, %c0_10] : memref<36x144xbf16, #tpu.memory_space<vmem>>, vector<4x144xbf16>
    tpu.vector_store %arg6[%c4, %c0_10], %4 {strides = array<i32>} : memref<36x144xbf16, #tpu.memory_space<vmem>>, vector<4x144xbf16>,
    %c0_11 = arith.constant 0 : index
    %c0_12 = arith.constant 0 : index
    %c0_13 = arith.constant 0 : index
    %c0_14 = arith.constant 0 : index
    %c2 = arith.constant 2 : index
    %6 = vector.load %arg2[%c0_11, %c0_12, %c0_13, %c0_14, %c2] : memref<1x1x1x4x198xbf16, #tpu.memory_space<vmem>>, vector<1x1x1x4x144xbf16>
    %7 = vector.shape_cast %6 : vector<1x1x1x4x144xbf16> to vector<4x144xbf16>
    %c8 = arith.constant 8 : index
    %c0_15 = arith.constant 0 : index
    %8 = vector.load %arg6[%c8, %c0_15] : memref<36x144xbf16, #tpu.memory_space<vmem>>, vector<4x144xbf16>
    tpu.vector_store %arg6[%c8, %c0_15], %7 {strides = array<i32>} : memref<36x144xbf16, #tpu.memory_space<vmem>>, vector<4x144xbf16>,
    %c0_16 = arith.constant 0 : index
    %c0_17 = arith.constant 0 : index
    %c0_18 = arith.constant 0 : index
    %c0_19 = arith.constant 0 : index
    %c18 = arith.constant 18 : index
    %9 = vector.load %arg2[%c0_16, %c0_17, %c0_18, %c0_19, %c18] : memref<1x1x1x4x198xbf16, #tpu.memory_space<vmem>>, vector<1x1x1x4x144xbf16>
    %10 = vector.shape_cast %9 : vector<1x1x1x4x144xbf16> to vector<4x144xbf16>
    %c12 = arith.constant 12 : index
    %c0_20 = arith.constant 0 : index
    %11 = vector.load %arg6[%c12, %c0_20] : memref<36x144xbf16, #tpu.memory_space<vmem>>, vector<4x144xbf16>
    tpu.vector_store %arg6[%c12, %c0_20], %10 {strides = array<i32>} : memref<36x144xbf16, #tpu.memory_space<vmem>>, vector<4x144xbf16>,
    %c0_21 = arith.constant 0 : index
    %c0_22 = arith.constant 0 : index
    %c0_23 = arith.constant 0 : index
    %c0_24 = arith.constant 0 : index
    %c19 = arith.constant 19 : index
    %12 = vector.load %arg2[%c0_21, %c0_22, %c0_23, %c0_24, %c19] : memref<1x1x1x4x198xbf16, #tpu.memory_space<vmem>>, vector<1x1x1x4x144xbf16>
    %13 = vector.shape_cast %12 : vector<1x1x1x4x144xbf16> to vector<4x144xbf16>
    %c16 = arith.constant 16 : index
    %c0_25 = arith.constant 0 : index
    %14 = vector.load %arg6[%c16, %c0_25] : memref<36x144xbf16, #tpu.memory_space<vmem>>, vector<4x144xbf16>
    tpu.vector_store %arg6[%c16, %c0_25], %13 {strides = array<i32>} : memref<36x144xbf16, #tpu.memory_space<vmem>>, vector<4x144xbf16>,
    %c0_26 = arith.constant 0 : index
    %c0_27 = arith.constant 0 : index
    %c0_28 = arith.constant 0 : index
    %c0_29 = arith.constant 0 : index
    %c20 = arith.constant 20 : index
    %15 = vector.load %arg2[%c0_26, %c0_27, %c0_28, %c0_29, %c20] : memref<1x1x1x4x198xbf16, #tpu.memory_space<vmem>>, vector<1x1x1x4x144xbf16>
    %16 = vector.shape_cast %15 : vector<1x1x1x4x144xbf16> to vector<4x144xbf16>
    %c20_30 = arith.constant 20 : index
    %c0_31 = arith.constant 0 : index
    %17 = vector.load %arg6[%c20_30, %c0_31] : memref<36x144xbf16, #tpu.memory_space<vmem>>, vector<4x144xbf16>
    tpu.vector_store %arg6[%c20_30, %c0_31], %16 {strides = array<i32>} : memref<36x144xbf16, #tpu.memory_space<vmem>>, vector<4x144xbf16>,
    %c0_32 = arith.constant 0 : index
    %c0_33 = arith.constant 0 : index
    %c0_34 = arith.constant 0 : index
    %c0_35 = arith.constant 0 : index
    %c36 = arith.constant 36 : index
    %18 = vector.load %arg2[%c0_32, %c0_33, %c0_34, %c0_35, %c36] : memref<1x1x1x4x198xbf16, #tpu.memory_space<vmem>>, vector<1x1x1x4x144xbf16>
    %19 = vector.shape_cast %18 : vector<1x1x1x4x144xbf16> to vector<4x144xbf16>
    %c24 = arith.constant 24 : index
    %c0_36 = arith.constant 0 : index
    %20 = vector.load %arg6[%c24, %c0_36] : memref<36x144xbf16, #tpu.memory_space<vmem>>, vector<4x144xbf16>
    tpu.vector_store %arg6[%c24, %c0_36], %19 {strides = array<i32>} : memref<36x144xbf16, #tpu.memory_space<vmem>>, vector<4x144xbf16>,
    %c0_37 = arith.constant 0 : index
    %c0_38 = arith.constant 0 : index
    %c0_39 = arith.constant 0 : index
    %c0_40 = arith.constant 0 : index
    %c37 = arith.constant 37 : index
    %21 = vector.load %arg2[%c0_37, %c0_38, %c0_39, %c0_40, %c37] : memref<1x1x1x4x198xbf16, #tpu.memory_space<vmem>>, vector<1x1x1x4x144xbf16>
    %22 = vector.shape_cast %21 : vector<1x1x1x4x144xbf16> to vector<4x144xbf16>
    %c28 = arith.constant 28 : index
    %c0_41 = arith.constant 0 : index
    %23 = vector.load %arg6[%c28, %c0_41] : memref<36x144xbf16, #tpu.memory_space<vmem>>, vector<4x144xbf16>
    tpu.vector_store %arg6[%c28, %c0_41], %22 {strides = array<i32>} : memref<36x144xbf16, #tpu.memory_space<vmem>>, vector<4x144xbf16>,
    %c0_42 = arith.constant 0 : index
    %c0_43 = arith.constant 0 : index
    %c0_44 = arith.constant 0 : index
    %c0_45 = arith.constant 0 : index
    %c38 = arith.constant 38 : index
    %24 = vector.load %arg2[%c0_42, %c0_43, %c0_44, %c0_45, %c38] : memref<1x1x1x4x198xbf16, #tpu.memory_space<vmem>>, vector<1x1x1x4x144xbf16>
    %25 = vector.shape_cast %24 : vector<1x1x1x4x144xbf16> to vector<4x144xbf16>
    %c32 = arith.constant 32 : index
    %c0_46 = arith.constant 0 : index
    %26 = vector.load %arg6[%c32, %c0_46] : memref<36x144xbf16, #tpu.memory_space<vmem>>, vector<4x144xbf16>
    tpu.vector_store %arg6[%c32, %c0_46], %25 {strides = array<i32>} : memref<36x144xbf16, #tpu.memory_space<vmem>>, vector<4x144xbf16>,
    %c0_47 = arith.constant 0 : index
    %c0_48 = arith.constant 0 : index
    %27 = vector.load %arg3[%c0_47, %c0_48] : memref<8x36xbf16, #tpu.memory_space<vmem>>, vector<8x36xbf16>
    %c0_49 = arith.constant 0 : index
    %c0_50 = arith.constant 0 : index
    %28 = vector.load %arg6[%c0_49, %c0_50] : memref<36x144xbf16, #tpu.memory_space<vmem>>, vector<36x144xbf16>
    %cst = arith.constant dense<0.000000e+00> : vector<8x144xf32>
    %29 = tpu.matmul %27, %28, %cst {dimension_numbers = #tpu.dot_dimension_numbers<[1], [0], [0], [1], [0, 0, 1, 1], [], []>} : vector<8x36xbf16>, vector<36x144xbf16>, vector<8x144xf32> -> vector<8x144xf32>
    %c0_51 = arith.constant 0 : index
    %c0_52 = arith.constant 0 : index
    %30 = vector.load %arg4[%c0_51, %c0_52] : memref<8x1xf32, #tpu.memory_space<vmem>>, vector<8x1xf32>
    %31 = vector.broadcast %30 : vector<8x1xf32> to vector<8x144xf32>
    %32 = arith.addf %29, %31 : vector<8x144xf32>
    %cst_53 = arith.constant 0.000000e+00 : f32
    %33 = vector.broadcast %cst_53 : f32 to vector<8x144xf32>
    %34 = arith.maximumf %32, %33 : vector<8x144xf32>
    %35 = vector.extract_strided_slice %34 {offsets = [0, 0], sizes = [8, 16], strides = [1, 1]} : vector<8x144xf32> to vector<8x16xf32>
    %c0_54 = arith.constant 0 : index
    %c0_55 = arith.constant 0 : index
    %c0_56 = arith.constant 0 : index
    %c0_57 = arith.constant 0 : index
    %36 = vector.load %arg5[%c0_54, %c0_55, %c0_56, %c0_57] : memref<1x8x8x16xf32, #tpu.memory_space<vmem>>, vector<1x8x1x16xf32>
    %37 = vector.shape_cast %36 : vector<1x8x1x16xf32> to vector<8x16xf32>
    %38 = vector.shape_cast %35 : vector<8x16xf32> to vector<1x8x1x16xf32>
    tpu.vector_store %arg5[%c0_54, %c0_55, %c0_56, %c0_57], %38 {strides = array<i32>} : memref<1x8x8x16xf32, #tpu.memory_space<vmem>>, vector<1x8x1x16xf32>,
    %39 = vector.extract_strided_slice %34 {offsets = [0, 18], sizes = [8, 16], strides = [1, 1]} : vector<8x144xf32> to vector<8x16xf32>
    %c0_58 = arith.constant 0 : index
    %c0_59 = arith.constant 0 : index
    %c1_60 = arith.constant 1 : index
    %c0_61 = arith.constant 0 : index
    %40 = vector.load %arg5[%c0_58, %c0_59, %c1_60, %c0_61] : memref<1x8x8x16xf32, #tpu.memory_space<vmem>>, vector<1x8x1x16xf32>
    %41 = vector.shape_cast %40 : vector<1x8x1x16xf32> to vector<8x16xf32>
    %42 = vector.shape_cast %39 : vector<8x16xf32> to vector<1x8x1x16xf32>
    tpu.vector_store %arg5[%c0_58, %c0_59, %c1_60, %c0_61], %42 {strides = array<i32>} : memref<1x8x8x16xf32, #tpu.memory_space<vmem>>, vector<1x8x1x16xf32>,
    %43 = vector.extract_strided_slice %34 {offsets = [0, 36], sizes = [8, 16], strides = [1, 1]} : vector<8x144xf32> to vector<8x16xf32>
    %c0_62 = arith.constant 0 : index
    %c0_63 = arith.constant 0 : index
    %c2_64 = arith.constant 2 : index
    %c0_65 = arith.constant 0 : index
    %44 = vector.load %arg5[%c0_62, %c0_63, %c2_64, %c0_65] : memref<1x8x8x16xf32, #tpu.memory_space<vmem>>, vector<1x8x1x16xf32>
    %45 = vector.shape_cast %44 : vector<1x8x1x16xf32> to vector<8x16xf32>
    %46 = vector.shape_cast %43 : vector<8x16xf32> to vector<1x8x1x16xf32>
    tpu.vector_store %arg5[%c0_62, %c0_63, %c2_64, %c0_65], %46 {strides = array<i32>} : memref<1x8x8x16xf32, #tpu.memory_space<vmem>>, vector<1x8x1x16xf32>,
    %47 = vector.extract_strided_slice %34 {offsets = [0, 54], sizes = [8, 16], strides = [1, 1]} : vector<8x144xf32> to vector<8x16xf32>
    %c0_66 = arith.constant 0 : index
    %c0_67 = arith.constant 0 : index
    %c3 = arith.constant 3 : index
    %c0_68 = arith.constant 0 : index
    %48 = vector.load %arg5[%c0_66, %c0_67, %c3, %c0_68] : memref<1x8x8x16xf32, #tpu.memory_space<vmem>>, vector<1x8x1x16xf32>
    %49 = vector.shape_cast %48 : vector<1x8x1x16xf32> to vector<8x16xf32>
    %50 = vector.shape_cast %47 : vector<8x16xf32> to vector<1x8x1x16xf32>
    tpu.vector_store %arg5[%c0_66, %c0_67, %c3, %c0_68], %50 {strides = array<i32>} : memref<1x8x8x16xf32, #tpu.memory_space<vmem>>, vector<1x8x1x16xf32>,
    %51 = vector.extract_strided_slice %34 {offsets = [0, 72], sizes = [8, 16], strides = [1, 1]} : vector<8x144xf32> to vector<8x16xf32>
    %c0_69 = arith.constant 0 : index
    %c0_70 = arith.constant 0 : index
    %c4_71 = arith.constant 4 : index
    %c0_72 = arith.constant 0 : index
    %52 = vector.load %arg5[%c0_69, %c0_70, %c4_71, %c0_72] : memref<1x8x8x16xf32, #tpu.memory_space<vmem>>, vector<1x8x1x16xf32>
    %53 = vector.shape_cast %52 : vector<1x8x1x16xf32> to vector<8x16xf32>
    %54 = vector.shape_cast %51 : vector<8x16xf32> to vector<1x8x1x16xf32>
    tpu.vector_store %arg5[%c0_69, %c0_70, %c4_71, %c0_72], %54 {strides = array<i32>} : memref<1x8x8x16xf32, #tpu.memory_space<vmem>>, vector<1x8x1x16xf32>,
    %55 = vector.extract_strided_slice %34 {offsets = [0, 90], sizes = [8, 16], strides = [1, 1]} : vector<8x144xf32> to vector<8x16xf32>
    %c0_73 = arith.constant 0 : index
    %c0_74 = arith.constant 0 : index
    %c5 = arith.constant 5 : index
    %c0_75 = arith.constant 0 : index
    %56 = vector.load %arg5[%c0_73, %c0_74, %c5, %c0_75] : memref<1x8x8x16xf32, #tpu.memory_space<vmem>>, vector<1x8x1x16xf32>
    %57 = vector.shape_cast %56 : vector<1x8x1x16xf32> to vector<8x16xf32>
    %58 = vector.shape_cast %55 : vector<8x16xf32> to vector<1x8x1x16xf32>
    tpu.vector_store %arg5[%c0_73, %c0_74, %c5, %c0_75], %58 {strides = array<i32>} : memref<1x8x8x16xf32, #tpu.memory_space<vmem>>, vector<1x8x1x16xf32>,
    %59 = vector.extract_strided_slice %34 {offsets = [0, 108], sizes = [8, 16], strides = [1, 1]} : vector<8x144xf32> to vector<8x16xf32>
    %c0_76 = arith.constant 0 : index
    %c0_77 = arith.constant 0 : index
    %c6 = arith.constant 6 : index
    %c0_78 = arith.constant 0 : index
    %60 = vector.load %arg5[%c0_76, %c0_77, %c6, %c0_78] : memref<1x8x8x16xf32, #tpu.memory_space<vmem>>, vector<1x8x1x16xf32>
    %61 = vector.shape_cast %60 : vector<1x8x1x16xf32> to vector<8x16xf32>
    %62 = vector.shape_cast %59 : vector<8x16xf32> to vector<1x8x1x16xf32>
    tpu.vector_store %arg5[%c0_76, %c0_77, %c6, %c0_78], %62 {strides = array<i32>} : memref<1x8x8x16xf32, #tpu.memory_space<vmem>>, vector<1x8x1x16xf32>,
    %63 = vector.extract_strided_slice %34 {offsets = [0, 126], sizes = [8, 16], strides = [1, 1]} : vector<8x144xf32> to vector<8x16xf32>
    %c0_79 = arith.constant 0 : index
    %c0_80 = arith.constant 0 : index
    %c7 = arith.constant 7 : index
    %c0_81 = arith.constant 0 : index
    %64 = vector.load %arg5[%c0_79, %c0_80, %c7, %c0_81] : memref<1x8x8x16xf32, #tpu.memory_space<vmem>>, vector<1x8x1x16xf32>
    %65 = vector.shape_cast %64 : vector<1x8x1x16xf32> to vector<8x16xf32>
    %66 = vector.shape_cast %63 : vector<8x16xf32> to vector<1x8x1x16xf32>
    tpu.vector_store %arg5[%c0_79, %c0_80, %c7, %c0_81], %66 {strides = array<i32>} : memref<1x8x8x16xf32, #tpu.memory_space<vmem>>, vector<1x8x1x16xf32>,
    return
  }
  func.func @transform_0(%arg0: i32, %arg1: i32) -> (i32, i32, i32, i32, i32) {
    %c0_i32 = arith.constant 0 : i32
    %c0_i32_0 = arith.constant 0 : i32
    %c0_i32_1 = arith.constant 0 : i32
    %c0_i32_2 = arith.constant 0 : i32
    return %arg0, %arg1, %c0_i32, %c0_i32_0, %c0_i32_1 : i32, i32, i32, i32, i32
  }
  func.func @transform_1(%arg0: i32, %arg1: i32) -> (i32, i32) {
    %c0_i32 = arith.constant 0 : i32
    %c0_i32_0 = arith.constant 0 : i32
    %c0_i32_1 = arith.constant 0 : i32
    return %c0_i32, %c0_i32_0 : i32, i32
  }
  func.func @transform_2(%arg0: i32, %arg1: i32) -> (i32, i32) {
    %c0_i32 = arith.constant 0 : i32
    %c0_i32_0 = arith.constant 0 : i32
    %c0_i32_1 = arith.constant 0 : i32
    return %c0_i32, %c0_i32_0 : i32, i32
  }
  func.func @transform_3(%arg0: i32, %arg1: i32) -> (i32, i32, i32, i32) {
    %c0_i32 = arith.constant 0 : i32
    %c0_i32_0 = arith.constant 0 : i32
    %c0_i32_1 = arith.constant 0 : i32
    return %arg0, %c0_i32, %arg1, %c0_i32_0 : i32, i32, i32, i32
  }
}

</mosaic_0001>

<llo_original>
// kernel: tpu_custom_call.1
$region0: #{tpu_custom_call.1}
  #allocation0 [shape = 'u32[]', space=smem, size = 0x4, offset = 0x4, fixed_abs, tag = 'smem constant byte address 0x4 - core index']
  #allocation1 [shape = 'u32[72,128]{1,0:T(1,128)}', space=vmem, size = 0x9000, scoped, tag = 'internal scratch']
  #allocation2 [shape = 'bf16[36,144]{1,0:T(8,128)(2,1)}', space=vmem, size = 0x5000, scoped, tag = 'scratch operand']
  %s0 = inlined_call_operand.hbm [shape: bf16[2,2,1,4,198], index: 0, kind: input, shape index: {}]
  %s1 = inlined_call_operand.vmem [shape: bf16[8,36], index: 1, kind: input, shape index: {}]
  %s2 = inlined_call_operand.vmem [shape: f32[8,1], index: 2, kind: input, shape index: {}]
  %s3 = inlined_call_operand.hbm [shape: f32[2,8,16,16], index: 3, kind: output, shape index: {}]
  %s4 = sld [smem:[#allocation0]]
  $region49: #{tpu_custom_call.1} parent=0
    _
  %s6 = ssub.s32 1, %s4
  %s7 = scalar_select 0, %s6, %s4
  $region1: #{tpu_custom_call.1} parent=0
    #allocation3 [shape = 'u8[4096]{0}', space=vmem, size = 0x1000, scoped, tag = 'input window, operand 0']
    #allocation4 [shape = 's32[2]{0}', space=sflag, size = 0x8, scoped, tag = 'scoped memory for tpu_custom_call.1']
    #allocation5 [shape = 's32[2]{0}', space=sflag, size = 0x8, scoped, tag = 'scoped memory for tpu_custom_call.1']
    #allocation6 [shape = 'u8[65536]{0}', space=vmem, size = 0x10000, scoped, tag = 'output window, operand 0']
    %8 = vsyncpa [#allocation4], 0
    %s9 = scalar_lea.sflag [#allocation4], 1
    %10 = vsyncpa %s9, 0
    %11 = vsyncpa [#allocation5], 0
    %s12 = scalar_lea.sflag [#allocation5], 1
    %13 = vsyncpa %s12, 0
    loop: start=0, step=1, limit=6
    $region2: #{tpu_custom_call.1} parent=1 // loop_pre_header
      _
    $region3: #{tpu_custom_call.1} parent=1 // loop_header
      %s15 = sphi 0, %s19
      %p16 = scmp.ge.s32.totalorder %s15, 6
      %s22 = sphi 0, %s34
      %s23 = sphi 0, %s30
      %s24 = sphi 0, %s22
      %s25 = sphi 0, %s23
      %s26 = sphi 0, %s24
      %s27 = sphi 0, %s25
      %s39 = sphi 0, %s41
      %s42 = sphi 0, %s39
      %s43 = sphi 0, %s42
      %s59 = sphi 0, %s43
      %s63 = sphi 0, %s63
      %s65 = sphi 0, %s63
      %s66 = sphi 0, %s65
      %s80 = sphi 0, %s66
      %s84 = sphi 0, %s84
      %s86 = sphi 0, %s84
      %s87 = sphi 0, %s86
      %s101 = sphi 0, %s87
      %s109 = sphi 0, %s111
      %s112 = sphi 0, %s109
      %s113 = sphi 0, %s112
      %s129 = sphi 0, %s113
    $region4: #{tpu_custom_call.1} parent=1 // loop_header_branch
      %18 = sbr.rel (%p16) target = $region8
    $region5: #{tpu_custom_call.1} parent=1 // loop_body
      %s20 = ssub.s32 %s15, 1
      %s21 = ssub.s32 %s15, 2
      %s28 = sadd.s32 1, %s23
      %p29 = scmp.ge.s32.totalorder %s28, 2
      %s30 = scalar_select %p29, 0, %s28
      %s31 = sadd.s32 1, %s22
      %s32 = scalar_select %p29, %s31, %s22
      %p33 = scmp.ge.s32.totalorder %s32, 2
      %s34 = scalar_select %p33, 0, %s32
      %s35 = ssub.s32 %s22, %s34
      %s36 = ssub.s32 %s23, %s30
      %s37 = sor.u32 %s35, %s36
      %p38 = scmp.eq.s32.totalorder %s37, 0
      %s40 = sadd.s32 %s39, 1
      %s41 = scalar_select %p38, %s39, %s40
      %p44 = pneg %p38
      %p45 = scmp.eq.s32.totalorder %s15, 3
      %p46 = por %p44, %p45
      %p47 = scmp.ne.s32.totalorder %s39, %s42
      %p48 = scmp.eq.s32.totalorder %s15, 0
      %p49 = por %p47, %p48
      %p50 = scmp.ne.s32.totalorder %s39, %s42
      %p51 = scmp.eq.s32.totalorder %s20, 3
      %p52 = por %p50, %p51
      %p53 = scmp.ne.s32.totalorder %s42, %s43
      %p54 = scmp.eq.s32.totalorder %s20, 0
      %p55 = por %p53, %p54
      %p56 = scmp.ne.s32.totalorder %s42, %s43
      %p57 = scmp.eq.s32.totalorder %s21, 3
      %p58 = por %p56, %p57
      %p60 = scmp.ne.s32.totalorder %s43, %s59
      %p61 = scmp.eq.s32.totalorder %s21, 0
      %p62 = por %p60, %p61
      %s64 = sadd.s32 %s63, 1
      %p67 = scmp.eq.s32.totalorder %s15, 3
      %p68 = scmp.ne.s32.totalorder %s63, %s65
      %p69 = scmp.eq.s32.totalorder %s15, 0
      %p70 = por %p68, %p69
      %p71 = scmp.ne.s32.totalorder %s63, %s65
      %p72 = scmp.eq.s32.totalorder %s20, 3
      %p73 = por %p71, %p72
      %p74 = scmp.ne.s32.totalorder %s65, %s66
      %p75 = scmp.eq.s32.totalorder %s20, 0
      %p76 = por %p74, %p75
      %p77 = scmp.ne.s32.totalorder %s65, %s66
      %p78 = scmp.eq.s32.totalorder %s21, 3
      %p79 = por %p77, %p78
      %p81 = scmp.ne.s32.totalorder %s66, %s80
      %p82 = scmp.eq.s32.totalorder %s21, 0
      %p83 = por %p81, %p82
      %s85 = sadd.s32 %s84, 1
      %p88 = scmp.eq.s32.totalorder %s15, 3
      %p89 = scmp.ne.s32.totalorder %s84, %s86
      %p90 = scmp.eq.s32.totalorder %s15, 0
      %p91 = por %p89, %p90
      %p92 = scmp.ne.s32.totalorder %s84, %s86
      %p93 = scmp.eq.s32.totalorder %s20, 3
      %p94 = por %p92, %p93
      %p95 = scmp.ne.s32.totalorder %s86, %s87
      %p96 = scmp.eq.s32.totalorder %s20, 0
      %p97 = por %p95, %p96
      %p98 = scmp.ne.s32.totalorder %s86, %s87
      %p99 = scmp.eq.s32.totalorder %s21, 3
      %p100 = por %p98, %p99
      %p102 = scmp.ne.s32.totalorder %s87, %s101
      %p103 = scmp.eq.s32.totalorder %s21, 0
      %p104 = por %p102, %p103
      %s105 = ssub.s32 %s22, %s34
      %s106 = ssub.s32 %s23, %s30
      %s107 = sor.u32 %s105, %s106
      %p108 = scmp.eq.s32.totalorder %s107, 0
      %s110 = sadd.s32 %s109, 1
      %s111 = scalar_select %p108, %s109, %s110
      %p114 = pneg %p108
      %p115 = scmp.eq.s32.totalorder %s15, 3
      %p116 = por %p114, %p115
      %p117 = scmp.ne.s32.totalorder %s109, %s112
      %p118 = scmp.eq.s32.totalorder %s15, 0
      %p119 = por %p117, %p118
      %p120 = scmp.ne.s32.totalorder %s109, %s112
      %p121 = scmp.eq.s32.totalorder %s20, 3
      %p122 = por %p120, %p121
      %p123 = scmp.ne.s32.totalorder %s112, %s113
      %p124 = scmp.eq.s32.totalorder %s20, 0
      %p125 = por %p123, %p124
      %p126 = scmp.ne.s32.totalorder %s112, %s113
      %p127 = scmp.eq.s32.totalorder %s21, 3
      %p128 = por %p126, %p127
      %p130 = scmp.ne.s32.totalorder %s113, %s129
      %p131 = scmp.eq.s32.totalorder %s21, 0
      %p132 = por %p130, %p131
      %p133 = scmp.le.s32.totalorder 1, %s15
      %p134 = scmp.lt.s32.totalorder %s15, 5
      %p135 = pnand %p133, %p134
      %p136 = pneg %p135
      // Predicated region
      $region9: #{tpu_custom_call.1} parent=5 // pred_check
        _
      $region10: #{tpu_custom_call.1} parent=5 // pred_check_branch
        %138 = sbr.rel (%p135) target = $region12
      $region11: #{tpu_custom_call.1} parent=5 // pred_region
        %s139 = ssub.s32 %s15, 1
        // Predicated region
        $region13: #{tpu_custom_call.1} parent=11 // pred_check
          %p140 = pneg %p76
        $region14: #{tpu_custom_call.1} parent=11 // pred_check_branch
          %142 = sbr.rel (%p140) target = $region16
        $region15: #{tpu_custom_call.1} parent=11 // pred_region
          _
        $region16: #{tpu_custom_call.1} parent=11 // pred_fallthru
          _
        // Predicated region
        $region17: #{tpu_custom_call.1} parent=11 // pred_check
          %p143 = pneg %p97
        $region18: #{tpu_custom_call.1} parent=11 // pred_check_branch
          %145 = sbr.rel (%p143) target = $region20
        $region19: #{tpu_custom_call.1} parent=11 // pred_region
          _
        $region20: #{tpu_custom_call.1} parent=11 // pred_fallthru
          _
      $region12: #{tpu_custom_call.1} parent=5 // pred_fallthru
        _
      %p146 = scmp.lt.s32.totalorder %s15, 4
      // Predicated region
      $region21: #{tpu_custom_call.1} parent=5 // pred_check
        %p147 = pneg %p146
      $region22: #{tpu_custom_call.1} parent=5 // pred_check_branch
        %149 = sbr.rel (%p147) target = $region24
      $region23: #{tpu_custom_call.1} parent=5 // pred_region
        // Predicated region
        $region25: #{tpu_custom_call.1} parent=23 // pred_check
          %p150 = pneg %p49
        $region26: #{tpu_custom_call.1} parent=23 // pred_check_branch
          %152 = sbr.rel (%p150) target = $region28
        $region27: #{tpu_custom_call.1} parent=23 // pred_region
          %s153 = sand.u32 %s39, 1
          %s154 = scalar_lea.sflag [#allocation4], %s153
          %s155 = sand.u32 %s39, 1
          %s156 = smul.addr %s155, 4
          %s157 = scalar_lea.vmem [#allocation3], %s156
          %159 = vsyncadd %s154, 0
          %s160 = smul.addr %s23, 2
          %s161 = smul.addr %s22, 4
          %s162 = sadd.s32 %s160, %s161
          %s163 = smul.addr %s162, 2
          %s164 = scalar_lea.hbm %s0, %s163
          %s166 = sshll.u32 %s164, 4
          %s167 = int_to_ptr.hbm [resolvable:$true] %s166
          %s168 = sshll.u32 %s157, 4
          %s169 = int_to_ptr.vmem [resolvable:$true] %s168
          %171 = dma.hbm_to_vmem [thread:$0]  %s167, 64, %s169, %s154
        $region28: #{tpu_custom_call.1} parent=23 // pred_fallthru
          _
      $region24: #{tpu_custom_call.1} parent=5 // pred_fallthru
        _
      %p172 = scmp.le.s32.totalorder 1, %s15
      %p173 = scmp.lt.s32.totalorder %s15, 5
      %p174 = pnand %p172, %p173
      %p175 = pneg %p174
      // Predicated region
      $region29: #{tpu_custom_call.1} parent=5 // pred_check
        _
      $region30: #{tpu_custom_call.1} parent=5 // pred_check_branch
        %177 = sbr.rel (%p174) target = $region32
      $region31: #{tpu_custom_call.1} parent=5 // pred_region
        %s178 = ssub.s32 %s15, 1
        %s179 = sand.u32 %s42, 1
        %s180 = scalar_lea.sflag [#allocation4], %s179
        %s181 = sand.u32 %s42, 1
        %s182 = smul.addr %s181, 4
        %s183 = scalar_lea.vmem [#allocation3], %s182
        // Predicated region
        $region33: #{tpu_custom_call.1} parent=31 // pred_check
          %p184 = pneg %p55
        $region34: #{tpu_custom_call.1} parent=31 // pred_check_branch
          %186 = sbr.rel (%p184) target = $region36
        $region35: #{tpu_custom_call.1} parent=31 // pred_region
          %188 = dma.done %s180, 64
        $region36: #{tpu_custom_call.1} parent=31 // pred_fallthru
          _
        %s189 = sand.u32 %s42, 1
        %s190 = scalar_lea.sflag [#allocation4], %s189
        %s191 = sand.u32 %s42, 1
        %s192 = smul.addr %s191, 4
        %s193 = scalar_lea.vmem [#allocation3], %s192
        %p194 = pneg %p55
        %p195 = pneg %p52
        %p196 = pneg %p76
        %p197 = pneg %p73
        %p198 = pneg %p97
        %p199 = pneg %p94
        %p200 = pneg %p125
        %p201 = pneg %p122
        %s202 = sand.u32 %s112, 1
        %s203 = scalar_lea.sflag [#allocation5], %s202
        %s204 = sand.u32 %s112, 1
        %s205 = smul.addr %s204, 64
        %s206 = scalar_lea.vmem [#allocation6], %s205
        %v208 = vld [vmem:[%s183] sm:$0xf]
        %210 = vst [vmem:[#allocation1] ss:$2 sm:$0xff] %v208
        %v211 = vld.sshfl [vmem:[#allocation1] sm:$0xff pattern:$0x75643120]
        %vm213 = vcmask 1041408
        %vm214 = vcmask 128004
        %vm215 = vmor %vm214, %vm213
        %216 = vst.msk [vmem:[#allocation2] sm:$0x33] %vm215, %v211
        %v217 = vld [vmem:[%s183] sm:$0xf]
        %s219 = scalar_lea.vmem [#allocation1], 1
        %220 = vst [vmem:[%s219] ss:$2 sm:$0xff] %v217
        %v221 = vld.sshfl [vmem:[#allocation1] sm:$0xff pattern:$0x75643120]
        %223 = vrot.lane.b32.xlu0 %v221, 127
        %v224 = vpop.permute.xlu0 %223
        %v225 = vrot.slane %v224, 4
        %vm226 = vcmask 1039360
        %v227 = vsel %vm226, %v224, %v225
        %vm229 = vcmask 1043458
        %vm230 = vcmask 130054
        %vm231 = vmor %vm230, %vm229
        %232 = vst.msk [vmem:[#allocation2] sm:$0xcc] %vm231, %v227
        %v233 = vld [vmem:[%s183] sm:$0xf]
        %235 = vst [vmem:[#allocation1] ss:$2 sm:$0xff] %v233
        %v236 = vld.sshfl [vmem:[#allocation1] sm:$0xff pattern:$0x75643120]
        %238 = vrot.lane.b32.xlu0 %v236, 126
        %v239 = vpop.permute.xlu0 %238
        %v240 = vrot.slane %v239, 4
        %vm241 = vcmask 1031168
        %v242 = vsel %vm241, %v239, %v240
        %244 = vst.msk [vmem:[#allocation2 + $0x8] sm:$0x33] %vm215, %v242
        %v245 = vld [vmem:[%s183] sm:$0xf]
        %s247 = scalar_lea.vmem [#allocation1], 1
        %248 = vst [vmem:[%s247] ss:$2 sm:$0xff] %v245
        %v249 = vld.sshfl [vmem:[#allocation1] sm:$0xff pattern:$0x75643120]
        %251 = vrot.lane.b32.xlu0 %v249, 110
        %v252 = vpop.permute.xlu0 %251
        %v253 = vrot.slane %v252, 4
        %vm254 = vcmask 900096
        %v255 = vsel %vm254, %v252, %v253
        %257 = vst.msk [vmem:[#allocation2 + $0x8] sm:$0xcc] %vm231, %v255
        %v258 = vld [vmem:[%s183] sm:$0xf]
        %260 = vst [vmem:[#allocation1] ss:$2 sm:$0xff] %v258
        %v261 = vld.sshfl [vmem:[#allocation1] sm:$0xff pattern:$0x75643120]
        %263 = vrot.lane.b32.xlu0 %v261, 109
        %v264 = vpop.permute.xlu0 %263
        %v265 = vrot.slane %v264, 4
        %vm266 = vcmask 891904
        %v267 = vsel %vm266, %v264, %v265
        %269 = vst.msk [vmem:[#allocation2 + $0x10] sm:$0x33] %vm215, %v267
        %v270 = vld [vmem:[%s183] sm:$0xf]
        %s272 = scalar_lea.vmem [#allocation1], 1
        %273 = vst [vmem:[%s272] ss:$2 sm:$0xff] %v270
        %v274 = vld.sshfl [vmem:[#allocation1] sm:$0xff pattern:$0x75643120]
        %276 = vrot.lane.b32.xlu0 %v274, 108
        %v277 = vpop.permute.xlu0 %276
        %v278 = vrot.slane %v277, 4
        %vm279 = vcmask 883712
        %v280 = vsel %vm279, %v277, %v278
        %282 = vst.msk [vmem:[#allocation2 + $0x10] sm:$0xcc] %vm231, %v280
        %v283 = vld [vmem:[%s183] sm:$0xf]
        %285 = vst [vmem:[#allocation1] ss:$2 sm:$0xff] %v283
        %v286 = vld.sshfl [vmem:[#allocation1] sm:$0xff pattern:$0x75643120]
        %288 = vrot.lane.b32.xlu0 %v286, 92
        %v289 = vpop.permute.xlu0 %288
        %v290 = vrot.slane %v289, 4
        %vm291 = vcmask 752640
        %v292 = vsel %vm291, %v289, %v290
        %294 = vst.msk [vmem:[#allocation2 + $0x18] sm:$0x33] %vm215, %v292
        %v295 = vld [vmem:[%s183] sm:$0xf]
        %s297 = scalar_lea.vmem [#allocation1], 1
        %298 = vst [vmem:[%s297] ss:$2 sm:$0xff] %v295
        %v299 = vld.sshfl [vmem:[#allocation1] sm:$0xff pattern:$0x75643120]
        %301 = vrot.lane.b32.xlu0 %v299, 91
        %v302 = vpop.permute.xlu0 %301
        %v303 = vrot.slane %v302, 4
        %vm304 = vcmask 744448
        %v305 = vsel %vm304, %v302, %v303
        %307 = vst.msk [vmem:[#allocation2 + $0x18] sm:$0xcc] %vm231, %v305
        %v308 = vld [vmem:[%s183] sm:$0xf]
        %310 = vst [vmem:[#allocation1] ss:$2 sm:$0xff] %v308
        %v311 = vld.sshfl [vmem:[#allocation1] sm:$0xff pattern:$0x75643120]
        %313 = vrot.lane.b32.xlu0 %v311, 90
        %v314 = vpop.permute.xlu0 %313
        %v315 = vrot.slane %v314, 4
        %vm316 = vcmask 736256
        %v317 = vsel %vm316, %v314, %v315
        %319 = vst.msk [vmem:[#allocation2 + $0x20] sm:$0x33] %vm215, %v317
        %v320 = vld [vmem:[%s1] sm:$0xf]
        %v321 = vld [vmem:[#allocation2] sm:$0xff]
        %v322 = vld [vmem:[#allocation2 + $0x8] sm:$0xff]
        %v323 = vld [vmem:[#allocation2 + $0x10] sm:$0xff]
        %v324 = vld [vmem:[#allocation2 + $0x18] sm:$0xff]
        %v325 = vld [vmem:[#allocation2 + $0x20] sm:$0x33]
        %v326 = vld [vmem:[%s2] sm:$0xff]
        %328 = vset.pattern.permute.xlu0 0
        %329 = vperm.xlu0 %328, %v326
        %v330 = vpop.permute.xlu0 %329
        %v337 = vunpack.c.l.b16 %v321
        %v338 = vunpack.c.h.b16 %v321
        %v339 = vunpack.c.l.b16 %v322
        %v340 = vunpack.c.h.b16 %v322
        %v341 = vunpack.c.l.b16 %v323
        %v342 = vunpack.c.h.b16 %v323
        %v343 = vunpack.c.l.b16 %v324
        %v344 = vunpack.c.h.b16 %v324
        %v345 = vunpack.c.l.b16 %v325
        %v346 = vunpack.c.h.b16 %v325
        %v347 = vpack.c.b16 %v339, %v337
        %v348 = vpack.c.b16 %v340, %v338
        %v349 = vpack.c.b16 %v343, %v341
        %v350 = vpack.c.b16 %v344, %v342
        %v351 = vpack.c.b16 %v345, %v345
        %v352 = vpack.c.b16 %v346, %v346
        %vm357 = vcmask 293888
        %v359 = vsel %vm357, %v320, 0
        %v362 = vsel %vm213, %v351, 0
        %v365 = vsel %vm213, %v352, 0
        %367 = vmatpush.bf16.msra.mxu0 0
        %368 = vmatpush.bf16.msra.mxu0 0
        %369 = vmatpush.bf16.msra.mxu0 0
        %370 = vmatpush.bf16.msra.mxu0 0
        %371 = vmatpush.bf16.msra.mxu0 0
        %372 = vmatpush.bf16.msra.mxu0 %v362
        %373 = vmatpush.bf16.msra.mxu0 %v349
        %374 = vmatpush.bf16.msra.mxu0 %v347
        %375 = vmatmul.bf16.gmra.mxu0 %v359
        %v376 = vpop.f32.mrf.mxu0
        %v377 = vadd.f32 %v330, %v376
        %v378 = vpop.f32.mrf.mxu0
        %379 = vdwg.mxu0
        %380 = vmatpush.bf16.msra.mxu0 0
        %381 = vmatpush.bf16.msra.mxu0 0
        %382 = vmatpush.bf16.msra.mxu0 0
        %383 = vmatpush.bf16.msra.mxu0 0
        %384 = vmatpush.bf16.msra.mxu0 0
        %385 = vmatpush.bf16.msra.mxu0 %v365
        %386 = vmatpush.bf16.msra.mxu0 %v350
        %387 = vmatpush.bf16.msra.mxu0 %v348
        %388 = vmatmul.bf16.gmra.mxu0 %v359
        %v389 = vpop.f32.mrf.mxu0
        %v390 = vadd.f32 %v330, %v389
        %v391 = vpop.f32.mrf.mxu0
        %392 = vdwg.mxu0
        %v393 = vmax.f32 %v377, 0.0
        %v394 = vmax.f32 %v390, 0.0
        %v396 = vrot.slane %v393, 1
        %v397 = vrot.slane %v393, 2
        %v398 = vrot.slane %v393, 3
        %v399 = vrot.slane %v393, 4
        %v400 = vrot.slane %v393, 5
        %v401 = vrot.slane %v393, 6
        %v402 = vrot.slane %v393, 7
        %vm410 = vcmask 122880
        %411 = vst.msk [vmem:[%s206] sm:$0x1] %vm410, %v393
        %412 = vst.msk [vmem:[%s206 + $0x8] sm:$0x1] %vm410, %v396
        %413 = vst.msk [vmem:[%s206 + $0x10] sm:$0x1] %vm410, %v397
        %414 = vst.msk [vmem:[%s206 + $0x18] sm:$0x1] %vm410, %v398
        %415 = vst.msk [vmem:[%s206 + $0x20] sm:$0x1] %vm410, %v399
        %416 = vst.msk [vmem:[%s206 + $0x28] sm:$0x1] %vm410, %v400
        %417 = vst.msk [vmem:[%s206 + $0x30] sm:$0x1] %vm410, %v401
        %418 = vst.msk [vmem:[%s206 + $0x38] sm:$0x1] %vm410, %v402
        %v419 = vperm.slane %v393, 0
        %v420 = vperm.slane %v396, 0
        %v421 = vperm.slane %v397, 0
        %v422 = vperm.slane %v398, 0
        %v423 = vperm.slane %v399, 0
        %v424 = vperm.slane %v400, 0
        %v425 = vperm.slane %v401, 0
        %v426 = vperm.slane %v402, 0
        %427 = vrot.lane.b32.xlu0 %v419, 110
        %v428 = vpop.permute.xlu0 %427
        %429 = vrot.lane.b32.xlu0 %v420, 110
        %v430 = vpop.permute.xlu0 %429
        %431 = vrot.lane.b32.xlu0 %v421, 110
        %v432 = vpop.permute.xlu0 %431
        %433 = vrot.lane.b32.xlu0 %v422, 110
        %v434 = vpop.permute.xlu0 %433
        %435 = vrot.lane.b32.xlu0 %v423, 110
        %v436 = vpop.permute.xlu0 %435
        %437 = vrot.lane.b32.xlu0 %v424, 110
        %v438 = vpop.permute.xlu0 %437
        %439 = vrot.lane.b32.xlu0 %v425, 110
        %v440 = vpop.permute.xlu0 %439
        %441 = vrot.lane.b32.xlu0 %v426, 110
        %v442 = vpop.permute.xlu0 %441
        %451 = vst.msk [vmem:[%s206 + $0x1] sm:$0x1] %vm410, %v428
        %452 = vst.msk [vmem:[%s206 + $0x9] sm:$0x1] %vm410, %v430
        %453 = vst.msk [vmem:[%s206 + $0x11] sm:$0x1] %vm410, %v432
        %454 = vst.msk [vmem:[%s206 + $0x19] sm:$0x1] %vm410, %v434
        %455 = vst.msk [vmem:[%s206 + $0x21] sm:$0x1] %vm410, %v436
        %456 = vst.msk [vmem:[%s206 + $0x29] sm:$0x1] %vm410, %v438
        %457 = vst.msk [vmem:[%s206 + $0x31] sm:$0x1] %vm410, %v440
        %458 = vst.msk [vmem:[%s206 + $0x39] sm:$0x1] %vm410, %v442
        %459 = vrot.lane.b32.xlu0 %v419, 92
        %v460 = vpop.permute.xlu0 %459
        %461 = vrot.lane.b32.xlu0 %v420, 92
        %v462 = vpop.permute.xlu0 %461
        %463 = vrot.lane.b32.xlu0 %v421, 92
        %v464 = vpop.permute.xlu0 %463
        %465 = vrot.lane.b32.xlu0 %v422, 92
        %v466 = vpop.permute.xlu0 %465
        %467 = vrot.lane.b32.xlu0 %v423, 92
        %v468 = vpop.permute.xlu0 %467
        %469 = vrot.lane.b32.xlu0 %v424, 92
        %v470 = vpop.permute.xlu0 %469
        %471 = vrot.lane.b32.xlu0 %v425, 92
        %v472 = vpop.permute.xlu0 %471
        %473 = vrot.lane.b32.xlu0 %v426, 92
        %v474 = vpop.permute.xlu0 %473
        %483 = vst.msk [vmem:[%s206 + $0x2] sm:$0x1] %vm410, %v460
        %484 = vst.msk [vmem:[%s206 + $0xa] sm:$0x1] %vm410, %v462
        %485 = vst.msk [vmem:[%s206 + $0x12] sm:$0x1] %vm410, %v464
        %486 = vst.msk [vmem:[%s206 + $0x1a] sm:$0x1] %vm410, %v466
        %487 = vst.msk [vmem:[%s206 + $0x22] sm:$0x1] %vm410, %v468
        %488 = vst.msk [vmem:[%s206 + $0x2a] sm:$0x1] %vm410, %v470
        %489 = vst.msk [vmem:[%s206 + $0x32] sm:$0x1] %vm410, %v472
        %490 = vst.msk [vmem:[%s206 + $0x3a] sm:$0x1] %vm410, %v474
        %491 = vrot.lane.b32.xlu0 %v419, 74
        %v492 = vpop.permute.xlu0 %491
        %493 = vrot.lane.b32.xlu0 %v420, 74
        %v494 = vpop.permute.xlu0 %493
        %495 = vrot.lane.b32.xlu0 %v421, 74
        %v496 = vpop.permute.xlu0 %495
        %497 = vrot.lane.b32.xlu0 %v422, 74
        %v498 = vpop.permute.xlu0 %497
        %499 = vrot.lane.b32.xlu0 %v423, 74
        %v500 = vpop.permute.xlu0 %499
        %501 = vrot.lane.b32.xlu0 %v424, 74
        %v502 = vpop.permute.xlu0 %501
        %503 = vrot.lane.b32.xlu0 %v425, 74
        %v504 = vpop.permute.xlu0 %503
        %505 = vrot.lane.b32.xlu0 %v426, 74
        %v506 = vpop.permute.xlu0 %505
        %515 = vst.msk [vmem:[%s206 + $0x3] sm:$0x1] %vm410, %v492
        %516 = vst.msk [vmem:[%s206 + $0xb] sm:$0x1] %vm410, %v494
        %517 = vst.msk [vmem:[%s206 + $0x13] sm:$0x1] %vm410, %v496
        %518 = vst.msk [vmem:[%s206 + $0x1b] sm:$0x1] %vm410, %v498
        %519 = vst.msk [vmem:[%s206 + $0x23] sm:$0x1] %vm410, %v500
        %520 = vst.msk [vmem:[%s206 + $0x2b] sm:$0x1] %vm410, %v502
        %521 = vst.msk [vmem:[%s206 + $0x33] sm:$0x1] %vm410, %v504
        %522 = vst.msk [vmem:[%s206 + $0x3b] sm:$0x1] %vm410, %v506
        %523 = vrot.lane.b32.xlu0 %v419, 56
        %v524 = vpop.permute.xlu0 %523
        %525 = vrot.lane.b32.xlu0 %v420, 56
        %v526 = vpop.permute.xlu0 %525
        %527 = vrot.lane.b32.xlu0 %v421, 56
        %v528 = vpop.permute.xlu0 %527
        %529 = vrot.lane.b32.xlu0 %v422, 56
        %v530 = vpop.permute.xlu0 %529
        %531 = vrot.lane.b32.xlu0 %v423, 56
        %v532 = vpop.permute.xlu0 %531
        %533 = vrot.lane.b32.xlu0 %v424, 56
        %v534 = vpop.permute.xlu0 %533
        %535 = vrot.lane.b32.xlu0 %v425, 56
        %v536 = vpop.permute.xlu0 %535
        %537 = vrot.lane.b32.xlu0 %v426, 56
        %v538 = vpop.permute.xlu0 %537
        %547 = vst.msk [vmem:[%s206 + $0x4] sm:$0x1] %vm410, %v524
        %548 = vst.msk [vmem:[%s206 + $0xc] sm:$0x1] %vm410, %v526
        %549 = vst.msk [vmem:[%s206 + $0x14] sm:$0x1] %vm410, %v528
        %550 = vst.msk [vmem:[%s206 + $0x1c] sm:$0x1] %vm410, %v530
        %551 = vst.msk [vmem:[%s206 + $0x24] sm:$0x1] %vm410, %v532
        %552 = vst.msk [vmem:[%s206 + $0x2c] sm:$0x1] %vm410, %v534
        %553 = vst.msk [vmem:[%s206 + $0x34] sm:$0x1] %vm410, %v536
        %554 = vst.msk [vmem:[%s206 + $0x3c] sm:$0x1] %vm410, %v538
        %555 = vrot.lane.b32.xlu0 %v419, 38
        %v556 = vpop.permute.xlu0 %555
        %557 = vrot.lane.b32.xlu0 %v420, 38
        %v558 = vpop.permute.xlu0 %557
        %559 = vrot.lane.b32.xlu0 %v421, 38
        %v560 = vpop.permute.xlu0 %559
        %561 = vrot.lane.b32.xlu0 %v422, 38
        %v562 = vpop.permute.xlu0 %561
        %563 = vrot.lane.b32.xlu0 %v423, 38
        %v564 = vpop.permute.xlu0 %563
        %565 = vrot.lane.b32.xlu0 %v424, 38
        %v566 = vpop.permute.xlu0 %565
        %567 = vrot.lane.b32.xlu0 %v425, 38
        %v568 = vpop.permute.xlu0 %567
        %569 = vrot.lane.b32.xlu0 %v426, 38
        %v570 = vpop.permute.xlu0 %569
        %579 = vst.msk [vmem:[%s206 + $0x5] sm:$0x1] %vm410, %v556
        %580 = vst.msk [vmem:[%s206 + $0xd] sm:$0x1] %vm410, %v558
        %581 = vst.msk [vmem:[%s206 + $0x15] sm:$0x1] %vm410, %v560
        %582 = vst.msk [vmem:[%s206 + $0x1d] sm:$0x1] %vm410, %v562
        %583 = vst.msk [vmem:[%s206 + $0x25] sm:$0x1] %vm410, %v564
        %584 = vst.msk [vmem:[%s206 + $0x2d] sm:$0x1] %vm410, %v566
        %585 = vst.msk [vmem:[%s206 + $0x35] sm:$0x1] %vm410, %v568
        %586 = vst.msk [vmem:[%s206 + $0x3d] sm:$0x1] %vm410, %v570
        %587 = vrot.lane.b32.xlu0 %v419, 20
        %v588 = vpop.permute.xlu0 %587
        %589 = vrot.lane.b32.xlu0 %v420, 20
        %v590 = vpop.permute.xlu0 %589
        %591 = vrot.lane.b32.xlu0 %v421, 20
        %v592 = vpop.permute.xlu0 %591
        %593 = vrot.lane.b32.xlu0 %v422, 20
        %v594 = vpop.permute.xlu0 %593
        %595 = vrot.lane.b32.xlu0 %v423, 20
        %v596 = vpop.permute.xlu0 %595
        %597 = vrot.lane.b32.xlu0 %v424, 20
        %v598 = vpop.permute.xlu0 %597
        %599 = vrot.lane.b32.xlu0 %v425, 20
        %v600 = vpop.permute.xlu0 %599
        %601 = vrot.lane.b32.xlu0 %v426, 20
        %v602 = vpop.permute.xlu0 %601
        %611 = vst.msk [vmem:[%s206 + $0x6] sm:$0x1] %vm410, %v588
        %612 = vst.msk [vmem:[%s206 + $0xe] sm:$0x1] %vm410, %v590
        %613 = vst.msk [vmem:[%s206 + $0x16] sm:$0x1] %vm410, %v592
        %614 = vst.msk [vmem:[%s206 + $0x1e] sm:$0x1] %vm410, %v594
        %615 = vst.msk [vmem:[%s206 + $0x26] sm:$0x1] %vm410, %v596
        %616 = vst.msk [vmem:[%s206 + $0x2e] sm:$0x1] %vm410, %v598
        %617 = vst.msk [vmem:[%s206 + $0x36] sm:$0x1] %vm410, %v600
        %618 = vst.msk [vmem:[%s206 + $0x3e] sm:$0x1] %vm410, %v602
        %v620 = vrot.slane %v394, 7
        %vm621 = vcmask 1040384
        %v622 = vsel %vm621, %v393, %v620
        %vm623 = vcmask 1041409
        %v624 = vsel %vm623, %v393, %v620
        %v625 = vrot.slane %v624, 1
        %vm626 = vcmask 1042434
        %v627 = vsel %vm626, %v393, %v620
        %v628 = vrot.slane %v627, 2
        %vm629 = vcmask 1043459
        %v630 = vsel %vm629, %v393, %v620
        %v631 = vrot.slane %v630, 3
        %vm632 = vcmask 1044484
        %v633 = vsel %vm632, %v393, %v620
        %v634 = vrot.slane %v633, 4
        %vm635 = vcmask 1045509
        %v636 = vsel %vm635, %v393, %v620
        %v637 = vrot.slane %v636, 5
        %vm638 = vcmask 1046534
        %v639 = vsel %vm638, %v393, %v620
        %v640 = vrot.slane %v639, 6
        %vm641 = vcmask 1046528
        %v642 = vsel %vm641, %v620, %v393
        %v643 = vrot.slane %v642, 7
        %v644 = vperm.slane %v622, 0
        %v645 = vperm.slane %v622, 1
        %v646 = vperm.slane %v625, 0
        %v647 = vperm.slane %v625, 1
        %v648 = vperm.slane %v628, 0
        %v649 = vperm.slane %v628, 1
        %v650 = vperm.slane %v631, 0
        %v651 = vperm.slane %v631, 1
        %v652 = vperm.slane %v634, 0
        %v653 = vperm.slane %v634, 1
        %v654 = vperm.slane %v637, 0
        %v655 = vperm.slane %v637, 1
        %v656 = vperm.slane %v640, 0
        %v657 = vperm.slane %v640, 1
        %v658 = vperm.slane %v643, 0
        %v659 = vperm.slane %v643, 1
        %660 = vrot.lane.b32.xlu0 %v644, 2
        %v661 = vpop.permute.xlu0 %660
        %662 = vrot.lane.b32.xlu0 %v645, 2
        %v663 = vpop.permute.xlu0 %662
        %664 = vrot.lane.b32.xlu0 %v646, 2
        %v665 = vpop.permute.xlu0 %664
        %666 = vrot.lane.b32.xlu0 %v647, 2
        %v667 = vpop.permute.xlu0 %666
        %668 = vrot.lane.b32.xlu0 %v648, 2
        %v669 = vpop.permute.xlu0 %668
        %670 = vrot.lane.b32.xlu0 %v649, 2
        %v671 = vpop.permute.xlu0 %670
        %672 = vrot.lane.b32.xlu0 %v650, 2
        %v673 = vpop.permute.xlu0 %672
        %674 = vrot.lane.b32.xlu0 %v651, 2
        %v675 = vpop.permute.xlu0 %674
        %676 = vrot.lane.b32.xlu0 %v652, 2
        %v677 = vpop.permute.xlu0 %676
        %678 = vrot.lane.b32.xlu0 %v653, 2
        %v679 = vpop.permute.xlu0 %678
        %680 = vrot.lane.b32.xlu0 %v654, 2
        %v681 = vpop.permute.xlu0 %680
        %682 = vrot.lane.b32.xlu0 %v655, 2
        %v683 = vpop.permute.xlu0 %682
        %684 = vrot.lane.b32.xlu0 %v656, 2
        %v685 = vpop.permute.xlu0 %684
        %686 = vrot.lane.b32.xlu0 %v657, 2
        %v687 = vpop.permute.xlu0 %686
        %688 = vrot.lane.b32.xlu0 %v658, 2
        %v689 = vpop.permute.xlu0 %688
        %690 = vrot.lane.b32.xlu0 %v659, 2
        %v691 = vpop.permute.xlu0 %690
        %vm692 = vcmask 15360
        %v693 = vsel %vm692, %v661, %v663
        %v694 = vsel %vm692, %v665, %v667
        %v695 = vsel %vm692, %v669, %v671
        %v696 = vsel %vm692, %v673, %v675
        %v697 = vsel %vm692, %v677, %v679
        %v698 = vsel %vm692, %v681, %v683
        %v699 = vsel %vm692, %v685, %v687
        %v700 = vsel %vm692, %v689, %v691
        %709 = vst.msk [vmem:[%s206 + $0x7] sm:$0x1] %vm410, %v693
        %710 = vst.msk [vmem:[%s206 + $0xf] sm:$0x1] %vm410, %v694
        %711 = vst.msk [vmem:[%s206 + $0x17] sm:$0x1] %vm410, %v695
        %712 = vst.msk [vmem:[%s206 + $0x1f] sm:$0x1] %vm410, %v696
        %713 = vst.msk [vmem:[%s206 + $0x27] sm:$0x1] %vm410, %v697
        %714 = vst.msk [vmem:[%s206 + $0x2f] sm:$0x1] %vm410, %v698
        %715 = vst.msk [vmem:[%s206 + $0x37] sm:$0x1] %vm410, %v699
        %716 = vst.msk [vmem:[%s206 + $0x3f] sm:$0x1] %vm410, %v700
        %s717 = sand.u32 %s112, 1
        %s718 = scalar_lea.sflag [#allocation5], %s717
        %s719 = sand.u32 %s112, 1
        %s720 = smul.addr %s719, 64
        %s721 = scalar_lea.vmem [#allocation6], %s720
        // Predicated region
        $region37: #{tpu_custom_call.1} parent=31 // pred_check
          %p722 = pneg %p122
        $region38: #{tpu_custom_call.1} parent=31 // pred_check_branch
          %724 = sbr.rel (%p722) target = $region40
        $region39: #{tpu_custom_call.1} parent=31 // pred_region
          %726 = vsyncadd %s718, 0
          %s727 = smul.addr %s24, 16
          %s728 = sadd.s32 %s25, %s727
          %s729 = smul.addr %s728, 8
          %s730 = scalar_lea.hbm %s3, %s729
          %s731 = sshll.u32 %s721, 4
          %s732 = int_to_ptr.vmem [resolvable:$true] %s731
          %s733 = sshll.u32 %s730, 4
          %s734 = int_to_ptr.hbm [resolvable:$true] %s733
          %739 = dma.vmem_to_hbm [thread:$0]  %s732, 1024, %s734, %s718, 128, 256, 8
        $region40: #{tpu_custom_call.1} parent=31 // pred_fallthru
          _
      $region32: #{tpu_custom_call.1} parent=5 // pred_fallthru
        _
      %p740 = scmp.le.s32.totalorder 2, %s15
      // Predicated region
      $region41: #{tpu_custom_call.1} parent=5 // pred_check
        %p741 = pneg %p740
      $region42: #{tpu_custom_call.1} parent=5 // pred_check_branch
        %743 = sbr.rel (%p741) target = $region44
      $region43: #{tpu_custom_call.1} parent=5 // pred_region
        %s744 = ssub.s32 %s15, 2
        // Predicated region
        $region45: #{tpu_custom_call.1} parent=43 // pred_check
          %p745 = pneg %p128
        $region46: #{tpu_custom_call.1} parent=43 // pred_check_branch
          %747 = sbr.rel (%p745) target = $region48
        $region47: #{tpu_custom_call.1} parent=43 // pred_region
          %s748 = sand.u32 %s113, 1
          %s749 = scalar_lea.sflag [#allocation5], %s748
          %s750 = sand.u32 %s113, 1
          %s751 = smul.addr %s750, 64
          %s752 = scalar_lea.vmem [#allocation6], %s751
          %754 = dma.done %s749, 1024
        $region48: #{tpu_custom_call.1} parent=43 // pred_fallthru
          _
      $region44: #{tpu_custom_call.1} parent=5 // pred_fallthru
        _
    $region6: #{tpu_custom_call.1} parent=1 // loop_footer
      %s19 = sadd.s32 1, %s15
    $region7: #{tpu_custom_call.1} parent=1 // loop_footer_branch
      %14 = sbr.rel target = $region3
    $region8: #{tpu_custom_call.1} parent=1 // loop_exit
      _
    %755 = vsyncpa [#allocation4], 1
    %s756 = scalar_lea.sflag [#allocation4], 1
    %757 = vsyncpa %s756, 1
    %758 = vsyncpa [#allocation5], 1
    %s759 = scalar_lea.sflag [#allocation5], 1
    %760 = vsyncpa %s759, 1

</llo_original>
